<compile_context>
chip_gen: v7x
topology: tpu7x:2x2x1
jax: 0.10.0
libtpu: 0.0.40
codegen_flags: <defaults>
</compile_context>

<pallas_src>
import jax
import jax.numpy as jnp
from jax.experimental import pallas as pl
from jax.experimental.pallas import tpu as pltpu


def _round_up(x, m):
    return ((x + m - 1) // m) * m


def _vmem_tile_bytes(rows, cols, itemsize=4):
    """Bytes one f32 VMEM buffer of logical shape (rows, cols) occupies."""
    return _round_up(max(int(rows), 1), 8) * _round_up(max(int(cols), 1), 128) * itemsize


def _encode_kernel(x_ref, w1_ref, w2_ref, bias_ref, out_ref):
    x = x_ref[...]                                   # (T, I), may contain NaN
    nanmask = jnp.isnan(x)
    xm = jnp.where(nanmask, 0.0, x)                  # X[nan] = 0
    nn = (~nanmask).astype(jnp.float32)              # not-NaN mask (b folded into w2)
    acc = jnp.dot(xm, w1_ref[...], preferred_element_type=jnp.float32)
    acc = acc + jnp.dot(nn, w2_ref[...], preferred_element_type=jnp.float32)
    out_ref[...] = (acc + bias_ref[...]).astype(out_ref.dtype)


def prepare_vibo_q_params(qb_weight, qtheta_weight, qtheta_bias):
    """Fold the difficulty vector into the linear weights and drop the logvar half.

    Do this once per parameter update (hoisted out of the per-call path).

    Returns (w1, w2b, bias):
      w1   (I, K) f32 — acts on the NaN-masked responses X
      w2b  (I, K) f32 — diag(b) @ W_B, acts on the 0/1 not-NaN mask
      bias (1, K) f32
    Only the first K (mean) output columns of q_theta are kept — the logvar
    half is discarded by the reference slice anyway.
    """
    num_items = qb_weight.shape[0]
    num_skills = qtheta_weight.shape[0] // 2

    b = qb_weight[:, 0]                                   # (I,)
    w_mean = qtheta_weight[:num_skills, :]                # (K, 2I) mean rows only
    w1 = w_mean[:, :num_items].T                          # (I, K) acts on masked X
    w2b = b[:, None] * w_mean[:, num_items:].T            # (I, K) acts on not-NaN mask
    bias = qtheta_bias[:num_skills].reshape(1, -1)        # (1, K)
    return (w1.astype(jnp.float32),
            w2b.astype(jnp.float32),
            bias.astype(jnp.float32))


def vibo_q_encode(X, w1, w2b, bias, *, tile_n=None,
                  vmem_budget_bytes=32 * 1024 * 1024):
    """Pallas implementation of VIBO_Q.encode.

    X:    (N, I) float32, may contain NaN
    w1:   (I, K) float32 from prepare_vibo_q_params
    w2b:  (I, K) float32 from prepare_vibo_q_params
    bias: (1, K) float32 from prepare_vibo_q_params
    returns Theta: (N, K) float32
    """
    n_rows, num_items = X.shape
    k_out = w1.shape[1]
    assert w1.shape == (num_items, k_out)
    assert w2b.shape == (num_items, k_out)
    assert bias.shape == (1, k_out)

    # ---- VMEM accounting -------------------------------------------------
    # Resident (constant index_map) blocks: 2 weight slabs + bias.  Assume the
    # default 2 buffers here even though we request Buffered(1) below, so the
    # sizing is safe either way.
    w_bytes = 2 * (2 * _vmem_tile_bytes(num_items, k_out)
                   + _vmem_tile_bytes(1, k_out))
    # Per-row bytes of the double-buffered, pipelined X-in / Theta-out tiles.
    row_bytes = 2 * (_round_up(num_items, 128) + _round_up(k_out, 128)) * 4

    if tile_n is None:
        avail = max(vmem_budget_bytes - w_bytes, 8 * row_bytes)
        tile_n = avail // row_bytes
        if n_rows >= 16:
            # Keep >= 2 grid steps so v7x's two TensorCores both get work.
            tile_n = min(tile_n, _round_up(pl.cdiv(n_rows, 2), 8))
        tile_n = min(tile_n, 1024)       # diminishing returns above
    tile_n = max(8, (int(tile_n) // 8) * 8)

    grid = (pl.cdiv(n_rows, tile_n),)    # ragged last block masked by Pallas

    usage = (w_bytes
             + 2 * _vmem_tile_bytes(tile_n, num_items)
             + 2 * _vmem_tile_bytes(tile_n, k_out))
    vmem_limit = int(usage * 1.25) + (1 << 20)
    vmem_limit = max(vmem_limit, 16 << 20)
    vmem_limit = min(vmem_limit, 64 << 20)   # never above v7x physical VMEM

    # Single-buffer the resident blocks only when they are big enough to matter
    # (keeps the small-problem path on the battle-tested default pipeline).
    want_single_buffer = (2 * _vmem_tile_bytes(num_items, k_out)) > (1 << 20)

    def run(single_buffer_weights):
        const_kw = ({"pipeline_mode": pl.Buffered(1)}
                    if single_buffer_weights else {})
        in_specs = [
            pl.BlockSpec((tile_n, num_items), lambda i: (i, 0)),      # X tile (pipelined)
            pl.BlockSpec((num_items, k_out), lambda i: (0, 0), **const_kw),  # W_x  (resident)
            pl.BlockSpec((num_items, k_out), lambda i: (0, 0), **const_kw),  # W_b·b (resident)
            pl.BlockSpec((1, k_out), lambda i: (0, 0), **const_kw),          # bias (resident)
        ]
        return pl.pallas_call(
            _encode_kernel,
            out_shape=jax.ShapeDtypeStruct((n_rows, k_out), jnp.float32),
            grid=grid,
            in_specs=in_specs,
            out_specs=pl.BlockSpec((tile_n, k_out), lambda i: (i, 0)),
            compiler_params=pltpu.CompilerParams(
                dimension_semantics=("parallel",),
                vmem_limit_bytes=vmem_limit,
            ),
        )(X, w1, w2b, bias)

    if not want_single_buffer:
        return run(False)
    try:
        return run(True)
    except Exception:
        # pipeline_mode / Buffered(1) not supported on this jax version —
        # fall back to default double-buffered resident blocks (the VMEM
        # budget above already assumed 2 buffers, so this still fits).
        return run(False)


def _reference_encode(X, qb_weight, qtheta_weight, qtheta_bias, num_skills):
    """Pure-JAX reference mirroring the PyTorch code path."""
    n_rows, num_items = X.shape
    b = qb_weight[:, 0]
    B = jnp.broadcast_to(b[None, :], (n_rows, num_items))
    nanmask = jnp.isnan(X)
    Bm = jnp.where(nanmask, 0.0, B)
    Xm = jnp.where(nanmask, 0.0, X)
    cat = jnp.concatenate([Xm, Bm], axis=1)                 # (N, 2I)
    out = cat @ qtheta_weight.T + qtheta_bias               # (N, 2K)
    return out[:, :num_skills]


if __name__ == "__main__":
    key = jax.random.PRNGKey(0)
    k1, k2, k3, k4, k5 = jax.random.split(key, 5)

    num_items = 16   # rows of Q (columns of X)
    num_skills = 4   # cols of Q
    N = 40           # students (not a multiple of the tile -> ragged last block)

    # Deterministic synthetic parameters (shapes per module __init__).
    qb_weight = jax.random.normal(k1, (num_items, 2), dtype=jnp.float32)
    lim = 1.0 / jnp.sqrt(2.0 * num_items)
    qtheta_weight = jax.random.uniform(
        k2, (2 * num_skills, 2 * num_items), minval=-lim, maxval=lim,
        dtype=jnp.float32)
    qtheta_bias = jax.random.uniform(
        k3, (2 * num_skills,), minval=-lim, maxval=lim, dtype=jnp.float32)

    # Binary response matrix with some NaNs (missing responses).
    X = (jax.random.uniform(k4, (N, num_items)) > 0.5).astype(jnp.float32)
    nan_positions = jax.random.uniform(k5, (N, num_items)) < 0.15
    X = jnp.where(nan_positions, jnp.nan, X)

    # Weight prep hoisted out of the per-call path (once per parameter update).
    w1, w2b, bias = prepare_vibo_q_params(qb_weight, qtheta_weight, qtheta_bias)

    ref = _reference_encode(X, qb_weight, qtheta_weight, qtheta_bias, num_skills)

    # Explicit tile_n=16 -> 3-step grid with a masked ragged last block.
    theta = jax.block_until_ready(vibo_q_encode(X, w1, w2b, bias, tile_n=16))
    assert theta.shape == (N, num_skills)
    assert jnp.allclose(theta, ref, atol=1e-5, rtol=1e-5), "mismatch vs reference"

    # Auto-sized tile path (VMEM-budgeted sizing + >=2-step grid for v7x).
    theta2 = jax.block_until_ready(vibo_q_encode(X, w1, w2b, bias))
    assert theta2.shape == (N, num_skills)
    assert jnp.allclose(theta2, ref, atol=1e-5, rtol=1e-5), "mismatch vs reference (auto tile)"

    print("KERNEL_OK")
</pallas_src>

<mosaic_0001>
module attributes {stable_mosaic.version = 11 : i64} {
  func.func @_encode_kernel(%arg0: i32, %arg1: memref<16x16xf32, #tpu.memory_space<vmem>>, %arg2: memref<16x4xf32, #tpu.memory_space<vmem>>, %arg3: memref<16x4xf32, #tpu.memory_space<vmem>>, %arg4: memref<1x4xf32, #tpu.memory_space<vmem>>, %arg5: memref<16x4xf32, #tpu.memory_space<vmem>>) attributes {dimension_semantics = [#tpu.dimension_semantics<parallel>], iteration_bounds = array<i64: 3>, scalar_prefetch = 0 : i64, scratch_operands = 0 : i64, tpu.core_type = #tpu.core_type<tc>, window_params = [{transform_indices = @transform_0, window_bounds = array<i64: 16, 16>}, {pipeline_mode = #tpu.pipeline_mode<synchronous>, transform_indices = @transform_1, window_bounds = array<i64: 16, 4>}, {pipeline_mode = #tpu.pipeline_mode<synchronous>, transform_indices = @transform_2, window_bounds = array<i64: 16, 4>}, {pipeline_mode = #tpu.pipeline_mode<synchronous>, transform_indices = @transform_3, window_bounds = array<i64: 1, 4>}, {transform_indices = @transform_4, window_bounds = array<i64: 16, 4>}]} {
    %c0 = arith.constant 0 : index
    %c0_0 = arith.constant 0 : index
    %0 = vector.load %arg1[%c0, %c0_0] : memref<16x16xf32, #tpu.memory_space<vmem>>, vector<16x16xf32>
    %1 = arith.cmpf one, %0, %0 : vector<16x16xf32>
    %cst = arith.constant 0.000000e+00 : f32
    %2 = vector.broadcast %cst : f32 to vector<16x16xf32>
    %3 = arith.select %1, %2, %0 : vector<16x16xi1>, vector<16x16xf32>
    %cst_1 = arith.constant dense<true> : vector<16x16xi1>
    %4 = arith.xori %1, %cst_1 : vector<16x16xi1>
    %5 = arith.extui %4 : vector<16x16xi1> to vector<16x16xi32>
    %6 = arith.sitofp %5 : vector<16x16xi32> to vector<16x16xf32>
    %c0_2 = arith.constant 0 : index
    %c0_3 = arith.constant 0 : index
    %7 = vector.load %arg2[%c0_2, %c0_3] : memref<16x4xf32, #tpu.memory_space<vmem>>, vector<16x4xf32>
    %cst_4 = arith.constant dense<0.000000e+00> : vector<16x4xf32>
    %8 = tpu.matmul %3, %7, %cst_4 {dimension_numbers = #tpu.dot_dimension_numbers<[1], [0], [0], [1], [0, 0, 1, 1], [], []>} : vector<16x16xf32>, vector<16x4xf32>, vector<16x4xf32> -> vector<16x4xf32>
    %c0_5 = arith.constant 0 : index
    %c0_6 = arith.constant 0 : index
    %9 = vector.load %arg3[%c0_5, %c0_6] : memref<16x4xf32, #tpu.memory_space<vmem>>, vector<16x4xf32>
    %cst_7 = arith.constant dense<0.000000e+00> : vector<16x4xf32>
    %10 = tpu.matmul %6, %9, %cst_7 {dimension_numbers = #tpu.dot_dimension_numbers<[1], [0], [0], [1], [0, 0, 1, 1], [], []>} : vector<16x16xf32>, vector<16x4xf32>, vector<16x4xf32> -> vector<16x4xf32>
    %11 = arith.addf %8, %10 : vector<16x4xf32>
    %c0_8 = arith.constant 0 : index
    %c0_9 = arith.constant 0 : index
    %12 = vector.load %arg4[%c0_8, %c0_9] : memref<1x4xf32, #tpu.memory_space<vmem>>, vector<1x4xf32>
    %13 = vector.broadcast %12 : vector<1x4xf32> to vector<16x4xf32>
    %14 = arith.addf %11, %13 : vector<16x4xf32>
    %c0_10 = arith.constant 0 : index
    %c0_11 = arith.constant 0 : index
    %15 = vector.load %arg5[%c0_10, %c0_11] : memref<16x4xf32, #tpu.memory_space<vmem>>, vector<16x4xf32>
    tpu.vector_store %arg5[%c0_10, %c0_11], %14 {strides = array<i32>} : memref<16x4xf32, #tpu.memory_space<vmem>>, vector<16x4xf32>,
    return
  }
  func.func @transform_0(%arg0: i32) -> (i32, i32) {
    %c0_i32 = arith.constant 0 : i32
    %c0_i32_0 = arith.constant 0 : i32
    return %arg0, %c0_i32 : i32, i32
  }
  func.func @transform_1(%arg0: i32) -> (i32, i32) {
    %c0_i32 = arith.constant 0 : i32
    %c0_i32_0 = arith.constant 0 : i32
    %c0_i32_1 = arith.constant 0 : i32
    return %c0_i32, %c0_i32_0 : i32, i32
  }
  func.func @transform_2(%arg0: i32) -> (i32, i32) {
    %c0_i32 = arith.constant 0 : i32
    %c0_i32_0 = arith.constant 0 : i32
    %c0_i32_1 = arith.constant 0 : i32
    return %c0_i32, %c0_i32_0 : i32, i32
  }
  func.func @transform_3(%arg0: i32) -> (i32, i32) {
    %c0_i32 = arith.constant 0 : i32
    %c0_i32_0 = arith.constant 0 : i32
    %c0_i32_1 = arith.constant 0 : i32
    return %c0_i32, %c0_i32_0 : i32, i32
  }
  func.func @transform_4(%arg0: i32) -> (i32, i32) {
    %c0_i32 = arith.constant 0 : i32
    %c0_i32_0 = arith.constant 0 : i32
    return %arg0, %c0_i32 : i32, i32
  }
}

</mosaic_0001>

<llo_original>
// kernel: tpu_custom_call.1
$region0: #{tpu_custom_call.1}
  #allocation0 [shape = 'u32[]', space=smem, size = 0x4, offset = 0x4, fixed_abs, tag = 'smem constant byte address 0x4 - core index']
  #allocation1 [shape = 'u32[144,128]{1,0:T(1,128)}', space=vmem, size = 0x12000, scoped, tag = 'internal scratch']
  %s0 = inlined_call_operand.vmem [shape: f32[40,16], index: 0, kind: input, shape index: {}]
  %s1 = inlined_call_operand.vmem [shape: f32[16,4], index: 1, kind: input, shape index: {}]
  %s2 = inlined_call_operand.vmem [shape: f32[16,4], index: 2, kind: input, shape index: {}]
  %s3 = inlined_call_operand.vmem [shape: f32[1,4], index: 3, kind: input, shape index: {}]
  %s4 = inlined_call_operand.vmem [shape: f32[40,4], index: 4, kind: output, shape index: {}]
  %s5 = sld [smem:[#allocation0]]
  $region97: #{tpu_custom_call.1} parent=0
    _
  %s7 = ssub.s32 1, %s5
  %s8 = scalar_select 0, %s7, %s5
  $region1: #{tpu_custom_call.1} parent=0
    #allocation2 [shape = 'u8[16384]{0}', space=vmem, size = 0x4000, scoped, tag = 'output window, operand 0']
    loop: start=0, step=1, limit=5
    $region2: #{tpu_custom_call.1} parent=1 // loop_pre_header
      _
    $region3: #{tpu_custom_call.1} parent=1 // loop_header
      %s10 = sphi 0, %s14
      %p11 = scmp.ge.s32.totalorder %s10, 5
      %s20 = sphi 0, %s22
      %s23 = sphi 0, %s20
      %s24 = sphi 0, %s23
      %s40 = sphi 0, %s24
      %s44 = sphi 0, %s44
      %s46 = sphi 0, %s44
      %s47 = sphi 0, %s46
      %s61 = sphi 0, %s47
      %s65 = sphi 0, %s65
      %s67 = sphi 0, %s65
      %s68 = sphi 0, %s67
      %s82 = sphi 0, %s68
      %s86 = sphi 0, %s86
      %s88 = sphi 0, %s86
      %s89 = sphi 0, %s88
      %s103 = sphi 0, %s89
      %s109 = sphi 0, %s111
      %s112 = sphi 0, %s109
      %s113 = sphi 0, %s112
      %s129 = sphi 0, %s113
    $region4: #{tpu_custom_call.1} parent=1 // loop_header_branch
      %13 = sbr.rel (%p11) target = $region8
    $region5: #{tpu_custom_call.1} parent=1 // loop_body
      %s15 = ssub.s32 %s10, 1
      %s16 = ssub.s32 %s10, 2
      %s17 = sadd.s32 %s10, 1
      %s18 = ssub.s32 %s10, %s17
      %p19 = scmp.eq.s32.totalorder %s18, 0
      %s21 = sadd.s32 %s20, 1
      %s22 = scalar_select %p19, %s20, %s21
      %p25 = pneg %p19
      %p26 = scmp.eq.s32.totalorder %s10, 2
      %p27 = por %p25, %p26
      %p28 = scmp.ne.s32.totalorder %s20, %s23
      %p29 = scmp.eq.s32.totalorder %s10, 0
      %p30 = por %p28, %p29
      %p31 = scmp.ne.s32.totalorder %s20, %s23
      %p32 = scmp.eq.s32.totalorder %s15, 2
      %p33 = por %p31, %p32
      %p34 = scmp.ne.s32.totalorder %s23, %s24
      %p35 = scmp.eq.s32.totalorder %s15, 0
      %p36 = por %p34, %p35
      %p37 = scmp.ne.s32.totalorder %s23, %s24
      %p38 = scmp.eq.s32.totalorder %s16, 2
      %p39 = por %p37, %p38
      %p41 = scmp.ne.s32.totalorder %s24, %s40
      %p42 = scmp.eq.s32.totalorder %s16, 0
      %p43 = por %p41, %p42
      %s45 = sadd.s32 %s44, 1
      %p48 = scmp.eq.s32.totalorder %s10, 2
      %p49 = scmp.ne.s32.totalorder %s44, %s46
      %p50 = scmp.eq.s32.totalorder %s10, 0
      %p51 = por %p49, %p50
      %p52 = scmp.ne.s32.totalorder %s44, %s46
      %p53 = scmp.eq.s32.totalorder %s15, 2
      %p54 = por %p52, %p53
      %p55 = scmp.ne.s32.totalorder %s46, %s47
      %p56 = scmp.eq.s32.totalorder %s15, 0
      %p57 = por %p55, %p56
      %p58 = scmp.ne.s32.totalorder %s46, %s47
      %p59 = scmp.eq.s32.totalorder %s16, 2
      %p60 = por %p58, %p59
      %p62 = scmp.ne.s32.totalorder %s47, %s61
      %p63 = scmp.eq.s32.totalorder %s16, 0
      %p64 = por %p62, %p63
      %s66 = sadd.s32 %s65, 1
      %p69 = scmp.eq.s32.totalorder %s10, 2
      %p70 = scmp.ne.s32.totalorder %s65, %s67
      %p71 = scmp.eq.s32.totalorder %s10, 0
      %p72 = por %p70, %p71
      %p73 = scmp.ne.s32.totalorder %s65, %s67
      %p74 = scmp.eq.s32.totalorder %s15, 2
      %p75 = por %p73, %p74
      %p76 = scmp.ne.s32.totalorder %s67, %s68
      %p77 = scmp.eq.s32.totalorder %s15, 0
      %p78 = por %p76, %p77
      %p79 = scmp.ne.s32.totalorder %s67, %s68
      %p80 = scmp.eq.s32.totalorder %s16, 2
      %p81 = por %p79, %p80
      %p83 = scmp.ne.s32.totalorder %s68, %s82
      %p84 = scmp.eq.s32.totalorder %s16, 0
      %p85 = por %p83, %p84
      %s87 = sadd.s32 %s86, 1
      %p90 = scmp.eq.s32.totalorder %s10, 2
      %p91 = scmp.ne.s32.totalorder %s86, %s88
      %p92 = scmp.eq.s32.totalorder %s10, 0
      %p93 = por %p91, %p92
      %p94 = scmp.ne.s32.totalorder %s86, %s88
      %p95 = scmp.eq.s32.totalorder %s15, 2
      %p96 = por %p94, %p95
      %p97 = scmp.ne.s32.totalorder %s88, %s89
      %p98 = scmp.eq.s32.totalorder %s15, 0
      %p99 = por %p97, %p98
      %p100 = scmp.ne.s32.totalorder %s88, %s89
      %p101 = scmp.eq.s32.totalorder %s16, 2
      %p102 = por %p100, %p101
      %p104 = scmp.ne.s32.totalorder %s89, %s103
      %p105 = scmp.eq.s32.totalorder %s16, 0
      %p106 = por %p104, %p105
      %s107 = ssub.s32 %s10, %s17
      %p108 = scmp.eq.s32.totalorder %s107, 0
      %s110 = sadd.s32 %s109, 1
      %s111 = scalar_select %p108, %s109, %s110
      %p114 = pneg %p108
      %p115 = scmp.eq.s32.totalorder %s10, 2
      %p116 = por %p114, %p115
      %p117 = scmp.ne.s32.totalorder %s109, %s112
      %p118 = scmp.eq.s32.totalorder %s10, 0
      %p119 = por %p117, %p118
      %p120 = scmp.ne.s32.totalorder %s109, %s112
      %p121 = scmp.eq.s32.totalorder %s15, 2
      %p122 = por %p120, %p121
      %p123 = scmp.ne.s32.totalorder %s112, %s113
      %p124 = scmp.eq.s32.totalorder %s15, 0
      %p125 = por %p123, %p124
      %p126 = scmp.ne.s32.totalorder %s112, %s113
      %p127 = scmp.eq.s32.totalorder %s16, 2
      %p128 = por %p126, %p127
      %p130 = scmp.ne.s32.totalorder %s113, %s129
      %p131 = scmp.eq.s32.totalorder %s16, 0
      %p132 = por %p130, %p131
      %p133 = scmp.le.s32.totalorder 1, %s10
      %p134 = scmp.lt.s32.totalorder %s10, 4
      %p135 = pnand %p133, %p134
      %p136 = pneg %p135
      // Predicated region
      $region9: #{tpu_custom_call.1} parent=5 // pred_check
        _
      $region10: #{tpu_custom_call.1} parent=5 // pred_check_branch
        %138 = sbr.rel (%p135) target = $region12
      $region11: #{tpu_custom_call.1} parent=5 // pred_region
        %s139 = ssub.s32 %s10, 1
        // Predicated region
        $region13: #{tpu_custom_call.1} parent=11 // pred_check
          %p140 = pneg %p57
        $region14: #{tpu_custom_call.1} parent=11 // pred_check_branch
          %142 = sbr.rel (%p140) target = $region16
        $region15: #{tpu_custom_call.1} parent=11 // pred_region
          _
        $region16: #{tpu_custom_call.1} parent=11 // pred_fallthru
          _
        // Predicated region
        $region17: #{tpu_custom_call.1} parent=11 // pred_check
          %p143 = pneg %p78
        $region18: #{tpu_custom_call.1} parent=11 // pred_check_branch
          %145 = sbr.rel (%p143) target = $region20
        $region19: #{tpu_custom_call.1} parent=11 // pred_region
          _
        $region20: #{tpu_custom_call.1} parent=11 // pred_fallthru
          _
        // Predicated region
        $region21: #{tpu_custom_call.1} parent=11 // pred_check
          %p146 = pneg %p99
        $region22: #{tpu_custom_call.1} parent=11 // pred_check_branch
          %148 = sbr.rel (%p146) target = $region24
        $region23: #{tpu_custom_call.1} parent=11 // pred_region
          _
        $region24: #{tpu_custom_call.1} parent=11 // pred_fallthru
          _
      $region12: #{tpu_custom_call.1} parent=5 // pred_fallthru
        _
      %p149 = scmp.lt.s32.totalorder %s10, 3
      // Predicated region
      $region25: #{tpu_custom_call.1} parent=5 // pred_check
        %p150 = pneg %p149
      $region26: #{tpu_custom_call.1} parent=5 // pred_check_branch
        %152 = sbr.rel (%p150) target = $region28
      $region27: #{tpu_custom_call.1} parent=5 // pred_region
        // Predicated region
        $region29: #{tpu_custom_call.1} parent=27 // pred_check
          %p153 = pneg %p30
        $region30: #{tpu_custom_call.1} parent=27 // pred_check_branch
          %155 = sbr.rel (%p153) target = $region32
        $region31: #{tpu_custom_call.1} parent=27 // pred_region
          %s156 = smul.u32 2, %s10
          %s157 = ssub.s32 5, %s156
          %p158 = scmp.lt.s32.totalorder %s157, 2
          %s159 = scalar_select %p158, %s157, 2
          %s160 = smul.u32 128, %s159
          %p161 = scmp.lt.s32.totalorder %s156, 4
          %s162 = scalar_select %p161, %s156, 4
          %s163 = smul.addr %s162, 8
          %s164 = scalar_lea.vmem %s0, %s163
          %s165 = smul.u32 2, %s10
          %s166 = ssub.s32 5, %s165
          %p167 = scmp.lt.s32.totalorder %s166, 2
          %s168 = scalar_select %p167, %s166, 2
          %s169 = smul.u32 128, %s168
        $region32: #{tpu_custom_call.1} parent=27 // pred_fallthru
          _
      $region28: #{tpu_custom_call.1} parent=5 // pred_fallthru
        _
      %p170 = scmp.le.s32.totalorder 1, %s10
      %p171 = scmp.lt.s32.totalorder %s10, 4
      %p172 = pnand %p170, %p171
      %p173 = pneg %p172
      // Predicated region
      $region33: #{tpu_custom_call.1} parent=5 // pred_check
        _
      $region34: #{tpu_custom_call.1} parent=5 // pred_check_branch
        %175 = sbr.rel (%p172) target = $region36
      $region35: #{tpu_custom_call.1} parent=5 // pred_region
        %s176 = ssub.s32 %s10, 1
        %s177 = smul.u32 2, %s15
        %s178 = ssub.s32 5, %s177
        %p179 = scmp.lt.s32.totalorder %s178, 2
        %s180 = scalar_select %p179, %s178, 2
        %s181 = smul.u32 128, %s180
        %p182 = scmp.lt.s32.totalorder %s177, 4
        %s183 = scalar_select %p182, %s177, 4
        %s184 = smul.addr %s183, 8
        %s185 = scalar_lea.vmem %s0, %s184
        %p186 = pneg %p36
        %p187 = pneg %p33
        %p188 = pneg %p57
        %p189 = pneg %p54
        %p190 = pneg %p78
        %p191 = pneg %p75
        %p192 = pneg %p99
        %p193 = pneg %p96
        %p194 = pneg %p125
        %p195 = pneg %p122
        %s196 = sand.u32 %s112, 1
        %s197 = sand.u32 %s112, 1
        %s198 = smul.addr %s197, 16
        %s199 = scalar_lea.vmem [#allocation2], %s198
        %s200 = smul.u32 2, %s15
        %s201 = ssub.s32 5, %s200
        %p202 = scmp.lt.s32.totalorder %s201, 2
        %s203 = scalar_select %p202, %s201, 2
        %s204 = smul.u32 128, %s203
        %p205 = scmp.lt.s32.totalorder %s200, 4
        %s206 = scalar_select %p205, %s200, 4
        %s207 = smul.addr %s206, 8
        %s208 = scalar_lea.vmem %s0, %s207
        %s209 = smul.u32 2, %s15
        %s210 = ssub.s32 5, %s209
        %p211 = scmp.lt.s32.totalorder %s210, 2
        %s212 = scalar_select %p211, %s210, 2
        %s213 = smul.u32 128, %s212
        %s214 = smul.u32 2, %s15
        %s215 = ssub.s32 5, %s214
        %p216 = scmp.lt.s32.totalorder %s215, 2
        %s217 = scalar_select %p216, %s215, 2
        %s218 = smul.u32 128, %s217
        %v219 = vld [vmem:[%s208] sm:$0xff]
        %v220 = vld [vmem:[%s208 + $0x8] sm:$0xff]
        %vm221 = vcmp.ne.f32.partialorder %v219, %v219
        %vm222 = vcmp.ne.f32.partialorder %v220, %v220
        %v223 = vsel %vm221, 0.0, %v219
        %v224 = vsel %vm222, 0.0, %v220
        %vm225 = vmxor %vm221, 1
        %vm226 = vmxor %vm222, 1
        %v227 = vsel %vm225, 1, 0
        %v228 = vsel %vm226, 1, 0
        %v229 = vcvt.s32.f32 %v227
        %v230 = vcvt.s32.f32 %v228
        %v231 = vld [vmem:[%s1] sm:$0xff]
        %v232 = vld [vmem:[%s1 + $0x8] sm:$0xff]
        %v233 = vld [vmem:[%s2] sm:$0xff]
        %v234 = vld [vmem:[%s2 + $0x8] sm:$0xff]
        %vm235 = vcmask 130048
        %v237 = vsel %vm235, %v229, 0
        %v240 = vsel %vm235, %v230, 0
        %242 = vmatprep.subr.mxu0 0.0
        %243 = vmatpush1.msra.mxu0 %v233
        %244 = vmatprep.subr.mxu0 0.0
        %245 = vmatpush1.msra.mxu0 %v234
        %246 = vmatprep.subr.mxu0 0.0
        %247 = vmatpush1.msra.mxu0 0.0
        %248 = vmatprep.subr.mxu0 0.0
        %249 = vmatpush1.msra.mxu0 0.0
        %250 = vmatprep.subr.mxu0 0.0
        %251 = vmatpush1.msra.mxu0 0.0
        %252 = vmatprep.subr.mxu0 0.0
        %253 = vmatpush1.msra.mxu0 0.0
        %254 = vmatprep.subr.mxu0 0.0
        %255 = vmatpush1.msra.mxu0 0.0
        %256 = vmatprep.subr.mxu0 0.0
        %257 = vmatpush1.msra.mxu0 0.0
        %258 = vmatprep.subr.mxu0 0.0
        %259 = vmatpush1.msra.mxu0 0.0
        %260 = vmatprep.subr.mxu0 0.0
        %261 = vmatpush1.msra.mxu0 0.0
        %262 = vmatprep.subr.mxu0 0.0
        %263 = vmatpush1.msra.mxu0 0.0
        %264 = vmatprep.subr.mxu0 0.0
        %265 = vmatpush1.msra.mxu0 0.0
        %266 = vmatprep.subr.mxu0 0.0
        %267 = vmatpush1.msra.mxu0 0.0
        %268 = vmatprep.subr.mxu0 0.0
        %269 = vmatpush1.msra.mxu0 0.0
        %270 = vmatprep.subr.mxu0 0.0
        %271 = vmatpush1.msra.mxu0 0.0
        %272 = vmatprep.subr.mxu0 0.0
        %273 = vmatpush1.msra.mxu0 0.0
        %274 = vmatprep.subr.mxu0 0.0
        %275 = vmatpush1.msra.mxu0 0.0
        %276 = vmatprep.subr.mxu0 0.0
        %277 = vmatpush1.msra.mxu0 0.0
        %278 = vmatprep.subr.mxu0 0.0
        %279 = vmatpush1.msra.mxu0 0.0
        %280 = vmatprep.subr.mxu0 0.0
        %281 = vmatpush1.msra.mxu0 0.0
        %282 = vmatprep.subr.mxu0 0.0
        %283 = vmatpush1.msra.mxu0 0.0
        %284 = vmatprep.subr.mxu0 0.0
        %285 = vmatpush1.msra.mxu0 0.0
        %286 = vmatprep.subr.mxu0 0.0
        %287 = vmatpush1.msra.mxu0 0.0
        %288 = vmatprep.subr.mxu0 0.0
        %289 = vmatpush1.msra.mxu0 0.0
        %290 = vmatprep.subr.mxu0 0.0
        %291 = vmatpush1.msra.mxu0 0.0
        %292 = vmatprep.subr.mxu0 0.0
        %293 = vmatpush1.msra.mxu0 0.0
        %294 = vmatprep.subr.mxu0 0.0
        %295 = vmatpush1.msra.mxu0 0.0
        %296 = vmatprep.subr.mxu0 0.0
        %297 = vmatpush1.msra.mxu0 0.0
        %298 = vmatprep.subr.mxu0 0.0
        %299 = vmatpush1.msra.mxu0 0.0
        %300 = vmatprep.subr.mxu0 0.0
        %301 = vmatpush1.msra.mxu0 0.0
        %302 = vmatprep.subr.mxu0 0.0
        %303 = vmatpush1.msra.mxu0 0.0
        %304 = vmatprep.subr.mxu0 0.0
        %305 = vmatpush1.msra.mxu0 0.0
        %306 = vmatprep.mubr.f32.mxu0 0.0
        %307 = vmatmul.mubr.f32.gmra.mrb[0].mxu0 %v237
        %v308 = vpop.f32.mrb[0].mxu0
        %v309 = vadd.f32 0.0, %v308
        %v310 = vpop.f32.mrb[0].mxu0
        %311 = vmatprep.mubr.f32.mxu0 0.0
        %312 = vmatmul.mubr.f32.gmra.mrb[0].mxu0 %v240
        %v313 = vpop.f32.mrb[0].mxu0
        %v314 = vadd.f32 0.0, %v313
        %v315 = vpop.f32.mrb[0].mxu0
        %316 = vdwg.mxu0
        %v318 = vsel %vm235, %v223, 0
        %v321 = vsel %vm235, %v224, 0
        %323 = vmatprep.subr.mxu0 0.0
        %324 = vmatpush1.msra.mxu0 %v231
        %325 = vmatprep.subr.mxu0 0.0
        %326 = vmatpush1.msra.mxu0 %v232
        %327 = vmatprep.subr.mxu0 0.0
        %328 = vmatpush1.msra.mxu0 0.0
        %329 = vmatprep.subr.mxu0 0.0
        %330 = vmatpush1.msra.mxu0 0.0
        %331 = vmatprep.subr.mxu0 0.0
        %332 = vmatpush1.msra.mxu0 0.0
        %333 = vmatprep.subr.mxu0 0.0
        %334 = vmatpush1.msra.mxu0 0.0
        %335 = vmatprep.subr.mxu0 0.0
        %336 = vmatpush1.msra.mxu0 0.0
        %337 = vmatprep.subr.mxu0 0.0
        %338 = vmatpush1.msra.mxu0 0.0
        %339 = vmatprep.subr.mxu0 0.0
        %340 = vmatpush1.msra.mxu0 0.0
        %341 = vmatprep.subr.mxu0 0.0
        %342 = vmatpush1.msra.mxu0 0.0
        %343 = vmatprep.subr.mxu0 0.0
        %344 = vmatpush1.msra.mxu0 0.0
        %345 = vmatprep.subr.mxu0 0.0
        %346 = vmatpush1.msra.mxu0 0.0
        %347 = vmatprep.subr.mxu0 0.0
        %348 = vmatpush1.msra.mxu0 0.0
        %349 = vmatprep.subr.mxu0 0.0
        %350 = vmatpush1.msra.mxu0 0.0
        %351 = vmatprep.subr.mxu0 0.0
        %352 = vmatpush1.msra.mxu0 0.0
        %353 = vmatprep.subr.mxu0 0.0
        %354 = vmatpush1.msra.mxu0 0.0
        %355 = vmatprep.subr.mxu0 0.0
        %356 = vmatpush1.msra.mxu0 0.0
        %357 = vmatprep.subr.mxu0 0.0
        %358 = vmatpush1.msra.mxu0 0.0
        %359 = vmatprep.subr.mxu0 0.0
        %360 = vmatpush1.msra.mxu0 0.0
        %361 = vmatprep.subr.mxu0 0.0
        %362 = vmatpush1.msra.mxu0 0.0
        %363 = vmatprep.subr.mxu0 0.0
        %364 = vmatpush1.msra.mxu0 0.0
        %365 = vmatprep.subr.mxu0 0.0
        %366 = vmatpush1.msra.mxu0 0.0
        %367 = vmatprep.subr.mxu0 0.0
        %368 = vmatpush1.msra.mxu0 0.0
        %369 = vmatprep.subr.mxu0 0.0
        %370 = vmatpush1.msra.mxu0 0.0
        %371 = vmatprep.subr.mxu0 0.0
        %372 = vmatpush1.msra.mxu0 0.0
        %373 = vmatprep.subr.mxu0 0.0
        %374 = vmatpush1.msra.mxu0 0.0
        %375 = vmatprep.subr.mxu0 0.0
        %376 = vmatpush1.msra.mxu0 0.0
        %377 = vmatprep.subr.mxu0 0.0
        %378 = vmatpush1.msra.mxu0 0.0
        %379 = vmatprep.subr.mxu0 0.0
        %380 = vmatpush1.msra.mxu0 0.0
        %381 = vmatprep.subr.mxu0 0.0
        %382 = vmatpush1.msra.mxu0 0.0
        %383 = vmatprep.subr.mxu0 0.0
        %384 = vmatpush1.msra.mxu0 0.0
        %385 = vmatprep.subr.mxu0 0.0
        %386 = vmatpush1.msra.mxu0 0.0
        %387 = vmatprep.mubr.f32.mxu0 0.0
        %388 = vmatmul.mubr.f32.gmra.mrb[0].mxu0 %v318
        %v389 = vpop.f32.mrb[0].mxu0
        %v390 = vadd.f32 %v309, %v389
        %v391 = vpop.f32.mrb[0].mxu0
        %392 = vmatprep.mubr.f32.mxu0 0.0
        %393 = vmatmul.mubr.f32.gmra.mrb[0].mxu0 %v321
        %v394 = vpop.f32.mrb[0].mxu0
        %v395 = vadd.f32 %v314, %v394
        %v396 = vpop.f32.mrb[0].mxu0
        %397 = vdwg.mxu0
        %v398 = vld [vmem:[%s3] sm:$0x1]
        %v400 = vlaneseq
        %v401 = vshrl.u32 %v400, 7
        %v402 = vsub.s32 0, %v401
        %v403 = vrot.slane %v398, %v402
        %v405 = vadd.f32 %v390, %v403
        %v406 = vadd.f32 %v395, %v403
        %vm407 = vcmask 31744
        %408 = vst.msk [vmem:[%s199] sm:$0xff] %vm407, %v405
        %409 = vst.msk [vmem:[%s199 + $0x8] sm:$0xff] %vm407, %v406
        %s410 = sand.u32 %s112, 1
        %s411 = sand.u32 %s112, 1
        %s412 = smul.addr %s411, 16
        %s413 = scalar_lea.vmem [#allocation2], %s412
        // Predicated region
        $region37: #{tpu_custom_call.1} parent=35 // pred_check
          %p414 = pneg %p122
        $region38: #{tpu_custom_call.1} parent=35 // pred_check_branch
          %416 = sbr.rel (%p414) target = $region40
        $region39: #{tpu_custom_call.1} parent=35 // pred_region
          %s417 = smul.u32 2, %s15
          %s418 = ssub.s32 5, %s417
          %p419 = scmp.lt.s32.totalorder %s418, 2
          %s420 = scalar_select %p419, %s418, 2
          %s421 = smul.u32 128, %s420
          %p422 = scmp.ne.s32.totalorder 0, %s421
          %s423 = smul.addr %s417, 8
          %s424 = scalar_lea.vmem %s4, %s423
          // Predicated region
          $region41: #{tpu_custom_call.1} parent=39 // pred_check
            %p425 = pneg %p422
          $region42: #{tpu_custom_call.1} parent=39 // pred_check_branch
            %427 = sbr.rel (%p425) target = $region44
          $region43: #{tpu_custom_call.1} parent=39 // pred_region
            // Predicated region
            $region45: #{tpu_custom_call.1} parent=43 // pred_check
              _
            $region46: #{tpu_custom_call.1} parent=43 // pred_check_branch
              %429 = sbr.rel (0) target = $region48
            $region47: #{tpu_custom_call.1} parent=43 // pred_region
              // Predicated region
              $region67: #{tpu_custom_call.1} parent=47 // pred_check
                _
              $region68: #{tpu_custom_call.1} parent=47 // pred_check_branch
                %480 = sbr.rel (0) target = $region70
              $region69: #{tpu_custom_call.1} parent=47 // pred_region
                %s481 = sshrl.u32 %s420, 1
                // While loop
                $region71: #{tpu_custom_call.1} parent=69 // loop_pre_header
                  _
                $region72: #{tpu_custom_call.1} parent=69 // loop_header
                  %s483 = sphi 0, %s485
                  %p484 = scmp.ge.s32.totalorder %s483, %s481
                  %s488 = sphi 0, %s497
                  %s489 = sphi %s413, %s500
                  %s490 = sphi %s424, %s501
                $region73: #{tpu_custom_call.1} parent=69 // loop_header_branch
                  %487 = sbr.rel (%p484) target = $region77
                $region74: #{tpu_custom_call.1} parent=69 // loop_body
                  %v491 = vld [vmem:[%s489] sm:$0xff]
                  %492 = vst [vmem:[%s490] sm:$0xff] %v491
                  %v493 = vld [vmem:[%s489 + $0x8] sm:$0xff]
                  %494 = vst [vmem:[%s490 + $0x8] sm:$0xff] %v493
                  %s495 = sadd.s32 1, %s488
                  %p496 = scmp.ge.s32.totalorder %s495, %s481
                  %s497 = scalar_select %p496, 0, %s495
                  %s498 = smul.u32 %s497, 16
                  %s499 = smul.u32 %s497, 16
                  %s500 = scalar_lea.vmem %s413, %s498 [#allocation2]
                  %s501 = scalar_lea.vmem %s424, %s499
                $region75: #{tpu_custom_call.1} parent=69 // loop_footer
                  %s485 = sadd.s32 %s483, 1
                $region76: #{tpu_custom_call.1} parent=69 // loop_footer_branch
                  %482 = sbr.rel target = $region72
                $region77: #{tpu_custom_call.1} parent=69 // loop_exit
                  _
                %s502 = sshrl.u32 %s420, 1
                %s503 = sand.u32 %s420, 1
                %s504 = smul.u32 %s502, 2
                %s505 = smul.u32 8, %s504
                %s506 = scalar_lea.vmem %s413, %s505 [#allocation2]
                %s507 = smul.u32 8, %s504
                %s508 = scalar_lea.vmem %s424, %s507
                // While loop
                $region78: #{tpu_custom_call.1} parent=69 // loop_pre_header
                  _
                $region79: #{tpu_custom_call.1} parent=69 // loop_header
                  %s510 = sphi 0, %s512
                  %p511 = scmp.ge.s32.totalorder %s510, %s503
                  %s515 = sphi 0, %s522
                  %s516 = sphi %s506, %s525
                  %s517 = sphi %s508, %s526
                $region80: #{tpu_custom_call.1} parent=69 // loop_header_branch
                  %514 = sbr.rel (%p511) target = $region84
                $region81: #{tpu_custom_call.1} parent=69 // loop_body
                  %v518 = vld [vmem:[%s516] sm:$0xff]
                  %519 = vst [vmem:[%s517] sm:$0xff] %v518
                  %s520 = sadd.s32 1, %s515
                  %p521 = scmp.ge.s32.totalorder %s520, %s503
                  %s522 = scalar_select %p521, 0, %s520
                  %s523 = smul.u32 %s522, 8
                  %s524 = smul.u32 %s522, 8
                  %s525 = scalar_lea.vmem %s506, %s523 [#allocation2]
                  %s526 = scalar_lea.vmem %s508, %s524
                $region82: #{tpu_custom_call.1} parent=69 // loop_footer
                  %s512 = sadd.s32 %s510, 1
                $region83: #{tpu_custom_call.1} parent=69 // loop_footer_branch
                  %509 = sbr.rel target = $region79
                $region84: #{tpu_custom_call.1} parent=69 // loop_exit
                  _
              $region70: #{tpu_custom_call.1} parent=47 // pred_fallthru
                _
              // Predicated region
              $region85: #{tpu_custom_call.1} parent=47 // pred_check
                _
              $region86: #{tpu_custom_call.1} parent=47 // pred_check_branch
                %528 = sbr.rel target = $region88
              $region87: #{tpu_custom_call.1} parent=47 // pred_region
                _
              $region88: #{tpu_custom_call.1} parent=47 // pred_fallthru
                _
            $region48: #{tpu_custom_call.1} parent=43 // pred_fallthru
              _
            // Predicated region
            $region49: #{tpu_custom_call.1} parent=43 // pred_check
              _
            $region50: #{tpu_custom_call.1} parent=43 // pred_check_branch
              %431 = sbr.rel target = $region52
            $region51: #{tpu_custom_call.1} parent=43 // pred_region
              %s433 = sshrl.u32 %s420, 1
              // While loop
              $region53: #{tpu_custom_call.1} parent=51 // loop_pre_header
                _
              $region54: #{tpu_custom_call.1} parent=51 // loop_header
                %s435 = sphi 0, %s437
                %p436 = scmp.ge.s32.totalorder %s435, %s433
                %s440 = sphi 0, %s449
                %s441 = sphi %s413, %s452
                %s442 = sphi %s424, %s453
              $region55: #{tpu_custom_call.1} parent=51 // loop_header_branch
                %439 = sbr.rel (%p436) target = $region59
              $region56: #{tpu_custom_call.1} parent=51 // loop_body
                %v443 = vld [vmem:[%s441] sm:$0xff]
                %444 = vst [vmem:[%s442] sm:$0xff] %v443
                %v445 = vld [vmem:[%s441 + $0x8] sm:$0xff]
                %446 = vst [vmem:[%s442 + $0x8] sm:$0xff] %v445
                %s447 = sadd.s32 1, %s440
                %p448 = scmp.ge.s32.totalorder %s447, %s433
                %s449 = scalar_select %p448, 0, %s447
                %s450 = smul.u32 %s449, 16
                %s451 = smul.u32 %s449, 16
                %s452 = scalar_lea.vmem %s413, %s450 [#allocation2]
                %s453 = scalar_lea.vmem %s424, %s451
              $region57: #{tpu_custom_call.1} parent=51 // loop_footer
                %s437 = sadd.s32 %s435, 1
              $region58: #{tpu_custom_call.1} parent=51 // loop_footer_branch
                %434 = sbr.rel target = $region54
              $region59: #{tpu_custom_call.1} parent=51 // loop_exit
                _
              %s454 = sshrl.u32 %s420, 1
              %s455 = sand.u32 %s420, 1
              %s456 = smul.u32 %s454, 2
              %s457 = smul.u32 8, %s456
              %s458 = scalar_lea.vmem %s413, %s457 [#allocation2]
              %s459 = smul.u32 8, %s456
              %s460 = scalar_lea.vmem %s424, %s459
              // While loop
              $region60: #{tpu_custom_call.1} parent=51 // loop_pre_header
                _
              $region61: #{tpu_custom_call.1} parent=51 // loop_header
                %s462 = sphi 0, %s464
                %p463 = scmp.ge.s32.totalorder %s462, %s455
                %s467 = sphi 0, %s474
                %s468 = sphi %s458, %s477
                %s469 = sphi %s460, %s478
              $region62: #{tpu_custom_call.1} parent=51 // loop_header_branch
                %466 = sbr.rel (%p463) target = $region66
              $region63: #{tpu_custom_call.1} parent=51 // loop_body
                %v470 = vld [vmem:[%s468] sm:$0xff]
                %471 = vst [vmem:[%s469] sm:$0xff] %v470
                %s472 = sadd.s32 1, %s467
                %p473 = scmp.ge.s32.totalorder %s472, %s455
                %s474 = scalar_select %p473, 0, %s472
                %s475 = smul.u32 %s474, 8
                %s476 = smul.u32 %s474, 8
                %s477 = scalar_lea.vmem %s458, %s475 [#allocation2]
                %s478 = scalar_lea.vmem %s460, %s476
              $region64: #{tpu_custom_call.1} parent=51 // loop_footer
                %s464 = sadd.s32 %s462, 1
              $region65: #{tpu_custom_call.1} parent=51 // loop_footer_branch
                %461 = sbr.rel target = $region61
              $region66: #{tpu_custom_call.1} parent=51 // loop_exit
                _
            $region52: #{tpu_custom_call.1} parent=43 // pred_fallthru
              _
          $region44: #{tpu_custom_call.1} parent=39 // pred_fallthru
            _
          %529 = vnop
        $region40: #{tpu_custom_call.1} parent=35 // pred_fallthru
          _
      $region36: #{tpu_custom_call.1} parent=5 // pred_fallthru
        _
      %p530 = scmp.le.s32.totalorder 2, %s10
      // Predicated region
      $region89: #{tpu_custom_call.1} parent=5 // pred_check
        %p531 = pneg %p530
      $region90: #{tpu_custom_call.1} parent=5 // pred_check_branch
        %533 = sbr.rel (%p531) target = $region92
      $region91: #{tpu_custom_call.1} parent=5 // pred_region
        %s534 = ssub.s32 %s10, 2
        // Predicated region
        $region93: #{tpu_custom_call.1} parent=91 // pred_check
          %p535 = pneg %p128
        $region94: #{tpu_custom_call.1} parent=91 // pred_check_branch
          %537 = sbr.rel (%p535) target = $region96
        $region95: #{tpu_custom_call.1} parent=91 // pred_region
          %s538 = sand.u32 %s113, 1
          %s539 = sand.u32 %s113, 1
          %s540 = smul.addr %s539, 16
          %s541 = scalar_lea.vmem [#allocation2], %s540
        $region96: #{tpu_custom_call.1} parent=91 // pred_fallthru
          _
      $region92: #{tpu_custom_call.1} parent=5 // pred_fallthru
        _
    $region6: #{tpu_custom_call.1} parent=1 // loop_footer
      %s14 = sadd.s32 1, %s10
    $region7: #{tpu_custom_call.1} parent=1 // loop_footer_branch
      %9 = sbr.rel target = $region3
    $region8: #{tpu_custom_call.1} parent=1 // loop_exit
      _

</llo_original>
